<compile_context>
chip_gen: v7x
topology: tpu7x:2x2x1
jax: 0.10.0
libtpu: 0.0.40
codegen_flags: <defaults>
</compile_context>

<pallas_src>
import functools

import jax
import jax.numpy as jnp
from jax.experimental import pallas as pl
from jax.experimental.pallas import tpu as pltpu


def _round_up(a, m):
    return (a + m - 1) // m * m


def _choose_row_tile(R, Cp, itemsize):
    """Row tile: multiple of 32 (covers f32/bf16/int8 sublane packing),
    <= 1024 rows, ~<= 512 KiB of input data per tile so double-buffered
    in+out tiles stay far below every generation's scoped VMEM limit
    (16 MiB v5e / 32 MiB v6e / 32 MiB v7x)."""
    tr = (512 * 1024) // max(1, Cp * itemsize)
    tr = max(32, min(1024, (tr // 32) * 32))
    tr = min(tr, _round_up(R, 32))
    return tr


# ----------------------------- Pallas kernels ------------------------------


def _stats_kernel(scalar_ref, x_ref, rm_ref, rv_ref, w_ref, b_ref,
                  scale_ref, shift_ref, new_rm_ref, new_rv_ref,
                  sum_acc, sq_acc, *, eps, momentum, max_r, max_d):
    """Training pass 1: accumulate per-channel sum / sumsq across row tiles,
    finalize renorm scale/shift and the running-statistics update.

    scalar_ref : SMEM (3,) f32 -> [1/R, warmup_factor, bessel]
    x_ref      : VMEM (TR, Cp) row tile
    rm/rv/w/b  : VMEM (1, Cp) f32 (resident across the grid)
    outputs    : scale, shift, new_rm, new_rv -> (1, Cp) f32
    scratch    : sum_acc, sq_acc -> (1, Cp) f32
    """
    i = pl.program_id(0)

    @pl.when(i == 0)
    def _init():
        sum_acc[...] = jnp.zeros_like(sum_acc)
        sq_acc[...] = jnp.zeros_like(sq_acc)

    # Single sweep: sum(x) and sum(x*x).  Zero-padded rows/lanes contribute
    # nothing, so wrapper-side padding is statistics-neutral.
    x = x_ref[...].astype(jnp.float32)
    sum_acc[...] += jnp.sum(x, axis=0, keepdims=True)
    sq_acc[...] += jnp.sum(x * x, axis=0, keepdims=True)

    @pl.when(i == pl.num_programs(0) - 1)
    def _finalize():
        inv_n = scalar_ref[0]      # 1 / (true, unpadded row count)
        warmup = scalar_ref[1]     # warmup factor
        bessel = scalar_ref[2]     # N / (N - 1), PyTorch uses batch dim only

        b_mean = sum_acc[...] * inv_n
        # TODO(synk): E[x^2]-E[x]^2 can cancel when |mean| >> std; all math is
        # f32 and clamped at 0, which is fine for typical activation scales.
        b_var = jnp.maximum(sq_acc[...] * inv_n - b_mean * b_mean, 0.0)
        b_std = jnp.sqrt(b_var + eps)

        running_mean = rm_ref[...]
        running_var = rv_ref[...]
        running_std = jnp.sqrt(running_var + eps)

        r = jnp.clip(b_std / running_std, 1.0 / max_r, max_r)
        d = jnp.clip((b_mean - running_mean) / running_std, -max_d, max_d)
        r = 1.0 + (r - 1.0) * warmup
        d = d * warmup

        # y = w * ((x - b_mean)/b_std * r + d) + b  ==  x * scale + shift
        w = w_ref[...]
        scale = w * r / b_std
        scale_ref[...] = scale
        shift_ref[...] = w * d + b_ref[...] - b_mean * scale

        new_rv_ref[...] = running_var + momentum * (b_var * bessel - running_var)
        new_rm_ref[...] = running_mean + momentum * (b_mean - running_mean)


def _affine_kernel(x_ref, scale_ref, shift_ref, y_ref):
    """Pass 2 (training) / eval: y = x * scale + shift, tiled over rows."""
    x = x_ref[...].astype(jnp.float32)
    y_ref[...] = (x * scale_ref[...] + shift_ref[...]).astype(y_ref.dtype)


# ------------------------------ JAX wrapper --------------------------------


def batch_renorm_forward(x, running_mean, running_var, weight, bias,
                         num_batches_tracked, *, training,
                         momentum=0.01, eps=1e-5, max_r=3.0, max_d=5.0,
                         warmup_steps=10000, smooth=False, row_tile=None):
    """Functional BatchRenorm1d forward.

    Returns:
      training=True : (y, new_running_mean, new_running_var, new_num_batches_tracked)
      training=False: y
    """
    if x.ndim < 2:
        raise ValueError("BatchRenorm1d expects a 2D (or more) tensor.")
    C = x.shape[1]

    # Move channel dim to lanes, flatten everything else into rows.
    if x.ndim == 2:
        x2 = x
        moved_shape = x.shape
    else:
        # TODO(synk): for ndim > 2 this moveaxis materializes an HBM transpose;
        # a fully layout-fused variant would grid the kernel over (N, C, L).
        x_moved = jnp.moveaxis(x, 1, -1)
        moved_shape = x_moved.shape
        x2 = x_moved.reshape(-1, C)
    R = x2.shape[0]

    # Lane-dense padding: channels -> multiple of 128 (full-width stores),
    # rows -> multiple of the row tile (exact grid).
    Cp = _round_up(C, 128)
    if row_tile is not None:
        TR = _round_up(int(row_tile), 32)
    else:
        TR = _choose_row_tile(R, Cp, jnp.dtype(x.dtype).itemsize)
    Rp = _round_up(R, TR)
    grid_rows = Rp // TR

    x_p = x2
    if Rp != R or Cp != C:
        x_p = jnp.pad(x2, ((0, Rp - R), (0, Cp - C)))

    def _pad_param(v, fill):
        v = v.astype(jnp.float32).reshape(1, C)
        if Cp != C:
            v = jnp.pad(v, ((0, 0), (0, Cp - C)), constant_values=fill)
        return v

    rm = _pad_param(running_mean, 0.0)
    rv = _pad_param(running_var, 1.0)   # pad 1.0 so padded lanes never divide by ~0
    w = _pad_param(weight, 1.0)
    b = _pad_param(bias, 0.0)

    row_spec = pl.BlockSpec((TR, Cp), lambda i: (i, 0))
    chan_spec = pl.BlockSpec((1, Cp), lambda i: (0, 0))

    if training:
        # Warmup factor (matches PyTorch's // vs smooth / semantics; the
        # reference's clamp_max is NOT in-place, so nbt simply increments).
        if warmup_steps > 0:
            if smooth:
                warmup_factor = num_batches_tracked.astype(jnp.float32) / warmup_steps
            else:
                warmup_factor = (num_batches_tracked // warmup_steps).astype(jnp.float32)
        else:
            warmup_factor = jnp.asarray(1.0, jnp.float32)

        n0 = x.shape[0]   # PyTorch's Bessel correction uses the batch dim only
        bessel = n0 / max(n0 - 1.0, 1.0)   # guard N==1 (PyTorch would yield inf)
        scalars = jnp.stack([jnp.asarray(1.0 / R, jnp.float32),
                             warmup_factor.astype(jnp.float32),
                             jnp.asarray(bessel, jnp.float32)])

        scale, shift, new_rm, new_rv = pl.pallas_call(
            functools.partial(_stats_kernel, eps=eps, momentum=momentum,
                              max_r=max_r, max_d=max_d),
            grid=(grid_rows,),
            out_shape=(jax.ShapeDtypeStruct((1, Cp), jnp.float32),) * 4,
            in_specs=[pl.BlockSpec(memory_space=pltpu.SMEM),   # [1/R, warmup, bessel]
                      row_spec, chan_spec, chan_spec, chan_spec, chan_spec],
            out_specs=(chan_spec,) * 4,
            scratch_shapes=[pltpu.VMEM((1, Cp), jnp.float32),
                            pltpu.VMEM((1, Cp), jnp.float32)],
            # Update the running stats in place (rm -> new_rm, rv -> new_rv).
            input_output_aliases={2: 2, 3: 3},
            compiler_params=pltpu.CompilerParams(
                dimension_semantics=("arbitrary",)),
        )(scalars, x_p, rm, rv, w, b)
    else:
        # Eval: fold running stats + affine into per-channel scale/shift
        # ((1, C)-cost prep; removes the per-element divide entirely).
        scale = w / jnp.sqrt(rv + eps)
        shift = b - rm * scale

    y_p = pl.pallas_call(
        _affine_kernel,
        grid=(grid_rows,),
        out_shape=jax.ShapeDtypeStruct((Rp, Cp), x.dtype),
        in_specs=[row_spec, chan_spec, chan_spec],
        out_specs=row_spec,
        compiler_params=pltpu.CompilerParams(
            dimension_semantics=("parallel",)),   # megacore-shardable on v7x
    )(x_p, scale, shift)

    y2 = y_p[:R, :C]
    if x.ndim == 2:
        y = y2
    else:
        y = jnp.moveaxis(y2.reshape(moved_shape), -1, 1)

    if not training:
        return y

    # clamp_max in the reference is not in-place -> effectively a no-op.
    new_nbt = num_batches_tracked + 1
    return y, new_rm[0, :C], new_rv[0, :C], new_nbt


# ------------------------- pure-JAX reference check -------------------------


def _ref_forward(x, rm, rv, w, b, nbt, *, training, momentum, eps, max_r,
                 max_d, warmup_steps, smooth, row_tile=None):
    del row_tile
    view = [1, x.shape[1]] + [1] * (x.ndim - 2)
    _v = lambda v: v.reshape(view)
    running_std = jnp.sqrt(rv + eps)
    if not training:
        return _v(w) * ((x - _v(rm)) / _v(running_std)) + _v(b)
    reduce_dims = tuple(i for i in range(x.ndim) if i != 1)
    b_mean = x.mean(reduce_dims)
    b_var = x.var(reduce_dims)
    b_std = jnp.sqrt(b_var + eps)
    r = jnp.clip(b_std / running_std, 1.0 / max_r, max_r)
    d = jnp.clip((b_mean - rm) / running_std, -max_d, max_d)
    if warmup_steps > 0:
        wf = (nbt / warmup_steps) if smooth else (nbt // warmup_steps)
        wf = wf.astype(jnp.float32)
        r = 1.0 + (r - 1.0) * wf
        d = d * wf
    y = (x - _v(b_mean)) / _v(b_std) * _v(r) + _v(d)
    unbiased_var = b_var * x.shape[0] / (x.shape[0] - 1)
    new_rv = rv + momentum * (unbiased_var - rv)
    new_rm = rm + momentum * (b_mean - rm)
    return _v(w) * y + _v(b), new_rm, new_rv, nbt + 1


# --------------------------------- main -------------------------------------

if __name__ == "__main__":
    key = jax.random.PRNGKey(0)
    k1, k2, k3, k4, k5, k6, k7 = jax.random.split(key, 7)

    hp = dict(momentum=0.01, eps=1e-5, max_r=3.0, max_d=5.0,
              warmup_steps=5, smooth=False)   # warmup=5 so renorm path is active

    # ---- 2D case: (N, C) ----
    N, C = 8, 32
    x = jax.random.normal(k1, (N, C), jnp.float32) * 2.0 + 0.5
    running_mean = jax.random.normal(k2, (C,), jnp.float32) * 0.1
    running_var = jax.random.uniform(k3, (C,), jnp.float32, minval=0.5, maxval=1.5)
    weight = jax.random.normal(k4, (C,), jnp.float32) * 0.1 + 1.0
    bias = jax.random.normal(k5, (C,), jnp.float32) * 0.1
    # TODO(synk): PyTorch buffer is int64; JAX default config uses int32 here.
    nbt = jnp.array(7, jnp.int32)

    y, new_rm, new_rv, new_nbt = batch_renorm_forward(
        x, running_mean, running_var, weight, bias, nbt, training=True, **hp)
    jax.block_until_ready((y, new_rm, new_rv, new_nbt))
    y_ref, rm_r, rv_r, nbt_r = _ref_forward(
        x, running_mean, running_var, weight, bias, nbt, training=True, **hp)
    assert jnp.allclose(y, y_ref, atol=1e-4, rtol=1e-4)
    assert jnp.allclose(new_rm, rm_r, atol=1e-5, rtol=1e-5)
    assert jnp.allclose(new_rv, rv_r, atol=1e-5, rtol=1e-5)
    assert int(new_nbt) == int(nbt_r)

    y_eval = batch_renorm_forward(
        x, running_mean, running_var, weight, bias, nbt, training=False, **hp)
    jax.block_until_ready(y_eval)
    y_eval_ref = _ref_forward(
        x, running_mean, running_var, weight, bias, nbt, training=False, **hp)
    assert jnp.allclose(y_eval, y_eval_ref, atol=1e-4, rtol=1e-4)

    # ---- 3D case: (N, C, L) — exercises the channel-to-lane layout glue ----
    N3, C3, L3 = 4, 6, 16
    x3 = jax.random.normal(k6, (N3, C3, L3), jnp.float32) * 1.5 - 0.3
    rm3 = jnp.zeros((C3,), jnp.float32)
    rv3 = jnp.ones((C3,), jnp.float32)
    w3 = jnp.ones((C3,), jnp.float32)
    b3 = jnp.zeros((C3,), jnp.float32)
    nbt3 = jnp.array(12, jnp.int32)

    y3, rm3_n, rv3_n, nbt3_n = batch_renorm_forward(
        x3, rm3, rv3, w3, b3, nbt3, training=True, **hp)
    jax.block_until_ready((y3, rm3_n, rv3_n))
    y3_ref, rm3_r, rv3_r, nbt3_r = _ref_forward(
        x3, rm3, rv3, w3, b3, nbt3, training=True, **hp)
    assert jnp.allclose(y3, y3_ref, atol=1e-4, rtol=1e-4)
    assert jnp.allclose(rm3_n, rm3_r, atol=1e-5, rtol=1e-5)
    assert jnp.allclose(rv3_n, rv3_r, atol=1e-5, rtol=1e-5)
    assert int(nbt3_n) == int(nbt3_r)

    # ---- multi-tile case: forces grid_rows > 1 (exercises the accumulator) ----
    Nm = 96
    xm = jax.random.normal(k7, (Nm, C), jnp.float32) * 2.0 + 0.5
    ym, rm_m, rv_m, nbt_m = batch_renorm_forward(
        xm, running_mean, running_var, weight, bias, nbt,
        training=True, row_tile=32, **hp)
    jax.block_until_ready((ym, rm_m, rv_m))
    ym_ref, rm_mr, rv_mr, nbt_mr = _ref_forward(
        xm, running_mean, running_var, weight, bias, nbt, training=True, **hp)
    assert jnp.allclose(ym, ym_ref, atol=1e-4, rtol=1e-4)
    assert jnp.allclose(rm_m, rm_mr, atol=1e-5, rtol=1e-5)
    assert jnp.allclose(rv_m, rv_mr, atol=1e-5, rtol=1e-5)
    assert int(nbt_m) == int(nbt_mr)

    print("KERNEL_OK")
</pallas_src>

<mosaic_0001>
module attributes {stable_mosaic.version = 11 : i64} {
  func.func @_stats_kernel(%arg0: i32, %arg1: memref<3xf32, #tpu.memory_space<smem>>, %arg2: memref<32x128xf32, #tpu.memory_space<vmem>>, %arg3: memref<1x128xf32, #tpu.memory_space<vmem>>, %arg4: memref<1x128xf32, #tpu.memory_space<vmem>>, %arg5: memref<1x128xf32, #tpu.memory_space<vmem>>, %arg6: memref<1x128xf32, #tpu.memory_space<vmem>>, %arg7: memref<1x128xf32, #tpu.memory_space<vmem>>, %arg8: memref<1x128xf32, #tpu.memory_space<vmem>>, %arg9: memref<1x128xf32, #tpu.memory_space<vmem>>, %arg10: memref<1x128xf32, #tpu.memory_space<vmem>>, %arg11: memref<1x128xf32, #tpu.memory_space<vmem>>, %arg12: memref<1x128xf32, #tpu.memory_space<vmem>>) attributes {dimension_semantics = [#tpu.dimension_semantics<arbitrary>], iteration_bounds = array<i64: 1>, scalar_prefetch = 0 : i64, scratch_operands = 2 : i64, tpu.core_type = #tpu.core_type<tc>, window_params = [{transform_indices = @transform_0, window_bounds = array<i64: 3>}, {transform_indices = @transform_1, window_bounds = array<i64: 32, 128>}, {pipeline_mode = #tpu.pipeline_mode<synchronous>, transform_indices = @transform_2, window_bounds = array<i64: 1, 128>}, {pipeline_mode = #tpu.pipeline_mode<synchronous>, transform_indices = @transform_3, window_bounds = array<i64: 1, 128>}, {pipeline_mode = #tpu.pipeline_mode<synchronous>, transform_indices = @transform_4, window_bounds = array<i64: 1, 128>}, {pipeline_mode = #tpu.pipeline_mode<synchronous>, transform_indices = @transform_5, window_bounds = array<i64: 1, 128>}, {pipeline_mode = #tpu.pipeline_mode<synchronous>, transform_indices = @transform_6, window_bounds = array<i64: 1, 128>}, {pipeline_mode = #tpu.pipeline_mode<synchronous>, transform_indices = @transform_7, window_bounds = array<i64: 1, 128>}, {pipeline_mode = #tpu.pipeline_mode<synchronous>, transform_indices = @transform_8, window_bounds = array<i64: 1, 128>}, {pipeline_mode = #tpu.pipeline_mode<synchronous>, transform_indices = @transform_9, window_bounds = array<i64: 1, 128>}]} {
    %c0_i32 = arith.constant 0 : i32
    %0 = arith.cmpi eq, %arg0, %c0_i32 : i32
    %1 = arith.extui %0 : i1 to i32
    %c0_i32_0 = arith.constant 0 : i32
    %2 = arith.cmpi ne, %1, %c0_i32_0 : i32
    scf.if %2 {
      %cst_13 = arith.constant 0.000000e+00 : f32
      %18 = vector.broadcast %cst_13 : f32 to vector<1x128xf32>
      %c0_14 = arith.constant 0 : index
      %c0_15 = arith.constant 0 : index
      %19 = vector.load %arg11[%c0_14, %c0_15] : memref<1x128xf32, #tpu.memory_space<vmem>>, vector<1x128xf32>
      tpu.vector_store %arg11[%c0_14, %c0_15], %18 {strides = array<i32>} : memref<1x128xf32, #tpu.memory_space<vmem>>, vector<1x128xf32>,
      %cst_16 = arith.constant 0.000000e+00 : f32
      %20 = vector.broadcast %cst_16 : f32 to vector<1x128xf32>
      %c0_17 = arith.constant 0 : index
      %c0_18 = arith.constant 0 : index
      %21 = vector.load %arg12[%c0_17, %c0_18] : memref<1x128xf32, #tpu.memory_space<vmem>>, vector<1x128xf32>
      tpu.vector_store %arg12[%c0_17, %c0_18], %20 {strides = array<i32>} : memref<1x128xf32, #tpu.memory_space<vmem>>, vector<1x128xf32>,
    } else {
    }
    %c0 = arith.constant 0 : index
    %c0_1 = arith.constant 0 : index
    %3 = vector.load %arg2[%c0, %c0_1] : memref<32x128xf32, #tpu.memory_space<vmem>>, vector<32x128xf32>
    %c0_2 = arith.constant 0 : index
    %c0_3 = arith.constant 0 : index
    %4 = vector.load %arg11[%c0_2, %c0_3] : memref<1x128xf32, #tpu.memory_space<vmem>>, vector<1x128xf32>
    %cst = arith.constant dense<0.000000e+00> : vector<128xf32>
    %5 = vector.multi_reduction <add>, %3, %cst [0] : vector<32x128xf32> to vector<128xf32>
    %6 = vector.shape_cast %5 : vector<128xf32> to vector<1x128xf32>
    %7 = arith.addf %4, %6 : vector<1x128xf32>
    %c0_4 = arith.constant 0 : index
    %c0_5 = arith.constant 0 : index
    %8 = vector.load %arg11[%c0_4, %c0_5] : memref<1x128xf32, #tpu.memory_space<vmem>>, vector<1x128xf32>
    tpu.vector_store %arg11[%c0_4, %c0_5], %7 {strides = array<i32>} : memref<1x128xf32, #tpu.memory_space<vmem>>, vector<1x128xf32>,
    %c0_6 = arith.constant 0 : index
    %c0_7 = arith.constant 0 : index
    %9 = vector.load %arg12[%c0_6, %c0_7] : memref<1x128xf32, #tpu.memory_space<vmem>>, vector<1x128xf32>
    %10 = arith.mulf %3, %3 : vector<32x128xf32>
    %cst_8 = arith.constant dense<0.000000e+00> : vector<128xf32>
    %11 = vector.multi_reduction <add>, %10, %cst_8 [0] : vector<32x128xf32> to vector<128xf32>
    %12 = vector.shape_cast %11 : vector<128xf32> to vector<1x128xf32>
    %13 = arith.addf %9, %12 : vector<1x128xf32>
    %c0_9 = arith.constant 0 : index
    %c0_10 = arith.constant 0 : index
    %14 = vector.load %arg12[%c0_9, %c0_10] : memref<1x128xf32, #tpu.memory_space<vmem>>, vector<1x128xf32>
    tpu.vector_store %arg12[%c0_9, %c0_10], %13 {strides = array<i32>} : memref<1x128xf32, #tpu.memory_space<vmem>>, vector<1x128xf32>,
    %c0_i32_11 = arith.constant 0 : i32
    %15 = arith.cmpi eq, %arg0, %c0_i32_11 : i32
    %16 = arith.extui %15 : i1 to i32
    %c0_i32_12 = arith.constant 0 : i32
    %17 = arith.cmpi ne, %16, %c0_i32_12 : i32
    scf.if %17 {
      %c0_13 = arith.constant 0 : index
      %18 = memref.load %arg1[%c0_13] : memref<3xf32, #tpu.memory_space<smem>>
      %c1 = arith.constant 1 : index
      %19 = memref.load %arg1[%c1] : memref<3xf32, #tpu.memory_space<smem>>
      %c2 = arith.constant 2 : index
      %20 = memref.load %arg1[%c2] : memref<3xf32, #tpu.memory_space<smem>>
      %c0_14 = arith.constant 0 : index
      %c0_15 = arith.constant 0 : index
      %21 = vector.load %arg11[%c0_14, %c0_15] : memref<1x128xf32, #tpu.memory_space<vmem>>, vector<1x128xf32>
      %22 = vector.broadcast %18 : f32 to vector<1x128xf32>
      %23 = arith.mulf %21, %22 : vector<1x128xf32>
      %c0_16 = arith.constant 0 : index
      %c0_17 = arith.constant 0 : index
      %24 = vector.load %arg12[%c0_16, %c0_17] : memref<1x128xf32, #tpu.memory_space<vmem>>, vector<1x128xf32>
      %25 = vector.broadcast %18 : f32 to vector<1x128xf32>
      %26 = arith.mulf %24, %25 : vector<1x128xf32>
      %27 = arith.mulf %23, %23 : vector<1x128xf32>
      %28 = arith.subf %26, %27 : vector<1x128xf32>
      %cst_18 = arith.constant 0.000000e+00 : f32
      %29 = vector.broadcast %cst_18 : f32 to vector<1x128xf32>
      %30 = arith.maximumf %28, %29 : vector<1x128xf32>
      %cst_19 = arith.constant 9.99999974E-6 : f32
      %31 = vector.broadcast %cst_19 : f32 to vector<1x128xf32>
      %32 = arith.addf %30, %31 : vector<1x128xf32>
      %33 = math.sqrt %32 : vector<1x128xf32>
      %c0_20 = arith.constant 0 : index
      %c0_21 = arith.constant 0 : index
      %34 = vector.load %arg3[%c0_20, %c0_21] : memref<1x128xf32, #tpu.memory_space<vmem>>, vector<1x128xf32>
      %c0_22 = arith.constant 0 : index
      %c0_23 = arith.constant 0 : index
      %35 = vector.load %arg4[%c0_22, %c0_23] : memref<1x128xf32, #tpu.memory_space<vmem>>, vector<1x128xf32>
      %cst_24 = arith.constant 9.99999974E-6 : f32
      %36 = vector.broadcast %cst_24 : f32 to vector<1x128xf32>
      %37 = arith.addf %35, %36 : vector<1x128xf32>
      %38 = math.sqrt %37 : vector<1x128xf32>
      %39 = arith.divf %33, %38 : vector<1x128xf32>
      %cst_25 = arith.constant 0.333333343 : f32
      %cst_26 = arith.constant 3.000000e+00 : f32
      %40 = vector.broadcast %cst_25 : f32 to vector<1x128xf32>
      %41 = arith.maximumf %40, %39 : vector<1x128xf32>
      %42 = vector.broadcast %cst_26 : f32 to vector<1x128xf32>
      %43 = arith.minimumf %42, %41 : vector<1x128xf32>
      %44 = arith.subf %23, %34 : vector<1x128xf32>
      %45 = arith.divf %44, %38 : vector<1x128xf32>
      %cst_27 = arith.constant -5.000000e+00 : f32
      %cst_28 = arith.constant 5.000000e+00 : f32
      %46 = vector.broadcast %cst_27 : f32 to vector<1x128xf32>
      %47 = arith.maximumf %46, %45 : vector<1x128xf32>
      %48 = vector.broadcast %cst_28 : f32 to vector<1x128xf32>
      %49 = arith.minimumf %48, %47 : vector<1x128xf32>
      %cst_29 = arith.constant 1.000000e+00 : f32
      %50 = vector.broadcast %cst_29 : f32 to vector<1x128xf32>
      %51 = arith.subf %43, %50 : vector<1x128xf32>
      %52 = vector.broadcast %19 : f32 to vector<1x128xf32>
      %53 = arith.mulf %51, %52 : vector<1x128xf32>
      %cst_30 = arith.constant 1.000000e+00 : f32
      %54 = vector.broadcast %cst_30 : f32 to vector<1x128xf32>
      %55 = arith.addf %54, %53 : vector<1x128xf32>
      %56 = vector.broadcast %19 : f32 to vector<1x128xf32>
      %57 = arith.mulf %49, %56 : vector<1x128xf32>
      %c0_31 = arith.constant 0 : index
      %c0_32 = arith.constant 0 : index
      %58 = vector.load %arg5[%c0_31, %c0_32] : memref<1x128xf32, #tpu.memory_space<vmem>>, vector<1x128xf32>
      %59 = arith.mulf %58, %55 : vector<1x128xf32>
      %60 = arith.divf %59, %33 : vector<1x128xf32>
      %c0_33 = arith.constant 0 : index
      %c0_34 = arith.constant 0 : index
      %61 = vector.load %arg7[%c0_33, %c0_34] : memref<1x128xf32, #tpu.memory_space<vmem>>, vector<1x128xf32>
      tpu.vector_store %arg7[%c0_33, %c0_34], %60 {strides = array<i32>} : memref<1x128xf32, #tpu.memory_space<vmem>>, vector<1x128xf32>,
      %62 = arith.mulf %58, %57 : vector<1x128xf32>
      %c0_35 = arith.constant 0 : index
      %c0_36 = arith.constant 0 : index
      %63 = vector.load %arg6[%c0_35, %c0_36] : memref<1x128xf32, #tpu.memory_space<vmem>>, vector<1x128xf32>
      %64 = arith.addf %62, %63 : vector<1x128xf32>
      %65 = arith.mulf %23, %60 : vector<1x128xf32>
      %66 = arith.subf %64, %65 : vector<1x128xf32>
      %c0_37 = arith.constant 0 : index
      %c0_38 = arith.constant 0 : index
      %67 = vector.load %arg8[%c0_37, %c0_38] : memref<1x128xf32, #tpu.memory_space<vmem>>, vector<1x128xf32>
      tpu.vector_store %arg8[%c0_37, %c0_38], %66 {strides = array<i32>} : memref<1x128xf32, #tpu.memory_space<vmem>>, vector<1x128xf32>,
      %68 = vector.broadcast %20 : f32 to vector<1x128xf32>
      %69 = arith.mulf %30, %68 : vector<1x128xf32>
      %70 = arith.subf %69, %35 : vector<1x128xf32>
      %cst_39 = arith.constant 0.00999999977 : f32
      %71 = vector.broadcast %cst_39 : f32 to vector<1x128xf32>
      %72 = arith.mulf %71, %70 : vector<1x128xf32>
      %73 = arith.addf %35, %72 : vector<1x128xf32>
      %c0_40 = arith.constant 0 : index
      %c0_41 = arith.constant 0 : index
      %74 = vector.load %arg10[%c0_40, %c0_41] : memref<1x128xf32, #tpu.memory_space<vmem>>, vector<1x128xf32>
      tpu.vector_store %arg10[%c0_40, %c0_41], %73 {strides = array<i32>} : memref<1x128xf32, #tpu.memory_space<vmem>>, vector<1x128xf32>,
      %75 = arith.subf %23, %34 : vector<1x128xf32>
      %cst_42 = arith.constant 0.00999999977 : f32
      %76 = vector.broadcast %cst_42 : f32 to vector<1x128xf32>
      %77 = arith.mulf %76, %75 : vector<1x128xf32>
      %78 = arith.addf %34, %77 : vector<1x128xf32>
      %c0_43 = arith.constant 0 : index
      %c0_44 = arith.constant 0 : index
      %79 = vector.load %arg9[%c0_43, %c0_44] : memref<1x128xf32, #tpu.memory_space<vmem>>, vector<1x128xf32>
      tpu.vector_store %arg9[%c0_43, %c0_44], %78 {strides = array<i32>} : memref<1x128xf32, #tpu.memory_space<vmem>>, vector<1x128xf32>,
    } else {
    }
    return
  }
  func.func @transform_0(%arg0: i32) -> i32 {
    %c0_i32 = arith.constant 0 : i32
    %c0_i32_0 = arith.constant 0 : i32
    return %c0_i32 : i32
  }
  func.func @transform_1(%arg0: i32) -> (i32, i32) {
    %c0_i32 = arith.constant 0 : i32
    %c0_i32_0 = arith.constant 0 : i32
    return %arg0, %c0_i32 : i32, i32
  }
  func.func @transform_2(%arg0: i32) -> (i32, i32) {
    %c0_i32 = arith.constant 0 : i32
    %c0_i32_0 = arith.constant 0 : i32
    %c0_i32_1 = arith.constant 0 : i32
    return %c0_i32, %c0_i32_0 : i32, i32
  }
  func.func @transform_3(%arg0: i32) -> (i32, i32) {
    %c0_i32 = arith.constant 0 : i32
    %c0_i32_0 = arith.constant 0 : i32
    %c0_i32_1 = arith.constant 0 : i32
    return %c0_i32, %c0_i32_0 : i32, i32
  }
  func.func @transform_4(%arg0: i32) -> (i32, i32) {
    %c0_i32 = arith.constant 0 : i32
    %c0_i32_0 = arith.constant 0 : i32
    %c0_i32_1 = arith.constant 0 : i32
    return %c0_i32, %c0_i32_0 : i32, i32
  }
  func.func @transform_5(%arg0: i32) -> (i32, i32) {
    %c0_i32 = arith.constant 0 : i32
    %c0_i32_0 = arith.constant 0 : i32
    %c0_i32_1 = arith.constant 0 : i32
    return %c0_i32, %c0_i32_0 : i32, i32
  }
  func.func @transform_6(%arg0: i32) -> (i32, i32) {
    %c0_i32 = arith.constant 0 : i32
    %c0_i32_0 = arith.constant 0 : i32
    %c0_i32_1 = arith.constant 0 : i32
    return %c0_i32, %c0_i32_0 : i32, i32
  }
  func.func @transform_7(%arg0: i32) -> (i32, i32) {
    %c0_i32 = arith.constant 0 : i32
    %c0_i32_0 = arith.constant 0 : i32
    %c0_i32_1 = arith.constant 0 : i32
    return %c0_i32, %c0_i32_0 : i32, i32
  }
  func.func @transform_8(%arg0: i32) -> (i32, i32) {
    %c0_i32 = arith.constant 0 : i32
    %c0_i32_0 = arith.constant 0 : i32
    %c0_i32_1 = arith.constant 0 : i32
    return %c0_i32, %c0_i32_0 : i32, i32
  }
  func.func @transform_9(%arg0: i32) -> (i32, i32) {
    %c0_i32 = arith.constant 0 : i32
    %c0_i32_0 = arith.constant 0 : i32
    %c0_i32_1 = arith.constant 0 : i32
    return %c0_i32, %c0_i32_0 : i32, i32
  }
}

</mosaic_0001>

<llo_original>
// kernel: tpu_custom_call.1
$region0: #{tpu_custom_call.1}
  #allocation0 [shape = 'u32[]', space=smem, size = 0x4, offset = 0x4, fixed_abs, tag = 'smem constant byte address 0x4 - core index']
  #allocation1 [shape = 'u32[144,128]{1,0:T(1,128)}', space=vmem, size = 0x12000, scoped, tag = 'internal scratch']
  #allocation2 [shape = 'f32[1,128]{1,0:T(1,128)}', space=vmem, size = 0x200, scoped, tag = 'scratch operand']
  #allocation3 [shape = 'f32[1,128]{1,0:T(1,128)}', space=vmem, size = 0x200, scoped, tag = 'scratch operand']
  %s0 = inlined_call_operand.vmem [shape: f32[3], index: 0, kind: input, shape index: {}]
  %s1 = inlined_call_operand.hbm [shape: f32[32,128], index: 1, kind: input, shape index: {}]
  %s2 = inlined_call_operand.hbm [shape: f32[1,128], index: 2, kind: input, shape index: {}, may-alias: {2,8}]
  %s3 = inlined_call_operand.hbm [shape: f32[1,128], index: 3, kind: input, shape index: {}, may-alias: {3,9}]
  %s4 = inlined_call_operand.vmem [shape: f32[1,128], index: 4, kind: input, shape index: {}]
  %s5 = inlined_call_operand.vmem [shape: f32[1,128], index: 5, kind: input, shape index: {}]
  %s6 = inlined_call_operand.hbm [shape: f32[1,128], index: 6, kind: output, shape index: {0}]
  %s7 = inlined_call_operand.hbm [shape: f32[1,128], index: 7, kind: output, shape index: {1}]
  %s8 = inlined_call_operand.hbm [shape: f32[1,128], index: 8, kind: output, shape index: {2}, may-alias: {2,8}]
  %s9 = inlined_call_operand.hbm [shape: f32[1,128], index: 9, kind: output, shape index: {3}, may-alias: {3,9}]
  %10 = xla_tuple %s6, %s7, %s8, %s9
  %s11 = sld [smem:[#allocation0]]
  $region82: #{tpu_custom_call.1} parent=0
    _
  %s13 = ssub.s32 1, %s11
  %s14 = scalar_select 0, %s13, %s11
  $region1: #{tpu_custom_call.1} parent=0
    #allocation4 [shape = 'u8[512]{0}', space=smem, size = 0x200, scoped, tag = 'input window, operand 0, single buffered']
    #allocation5 [shape = 's32[1]{0}', space=sflag, size = 0x4, scoped, tag = 'scoped memory for tpu_custom_call.1']
    #allocation6 [shape = 's32[1]{0}', space=sflag, size = 0x4, scoped, tag = 'scoped memory for tpu_custom_call.1']
    #allocation7 [shape = 's32[1]{0}', space=sflag, size = 0x4, scoped, tag = 'scoped memory for tpu_custom_call.1']
    #allocation8 [shape = 'u8[16384]{0}', space=vmem, size = 0x4000, scoped, tag = 'input window, operand 1, single buffered']
    #allocation9 [shape = 'u8[512]{0}', space=vmem, size = 0x400, scoped, tag = 'input window, operand 2, single buffered']
    #allocation10 [shape = 's32[1]{0}', space=sflag, size = 0x4, scoped, tag = 'scoped memory for tpu_custom_call.1']
    #allocation11 [shape = 'u8[512]{0}', space=vmem, size = 0x400, scoped, tag = 'input window, operand 3, single buffered']
    #allocation12 [shape = 'u8[512]{0}', space=vmem, size = 0x400, scoped, tag = 'output window, operand 0, single buffered']
    #allocation13 [shape = 'u8[512]{0}', space=vmem, size = 0x400, scoped, tag = 'output window, operand 1, single buffered']
    #allocation14 [shape = 's32[1]{0}', space=sflag, size = 0x4, scoped, tag = 'scoped memory for tpu_custom_call.1']
    #allocation15 [shape = 'u8[512]{0}', space=vmem, size = 0x400, scoped, tag = 'output window, operand 2, single buffered']
    #allocation16 [shape = 'u8[512]{0}', space=vmem, size = 0x400, scoped, tag = 'output window, operand 3, single buffered']
    #allocation17 [shape = 's32[1]{0}', space=sflag, size = 0x4, scoped, tag = 'scoped memory for tpu_custom_call.1']
    %15 = vsyncpa [#allocation7], 0
    %16 = vsyncpa [#allocation5], 0
    %17 = vsyncpa [#allocation10], 0
    %18 = vsyncpa [#allocation6], 0
    %19 = vsyncpa [#allocation14], 0
    %20 = vsyncpa [#allocation17], 0
    // Predicated region
    $region2: #{tpu_custom_call.1} parent=1 // pred_check
      _
    $region3: #{tpu_custom_call.1} parent=1 // pred_check_branch
      %22 = sbr.rel (0) target = $region5
    $region4: #{tpu_custom_call.1} parent=1 // pred_region
      %s24 = ssub.s32 16, 16
      %25 = vsyncadd [#allocation7], %s24
      %s27 = sshll.u32 %s0, 4
      %s28 = int_to_ptr.vmem [resolvable:$true] %s27
      %30 = dma.vmem_to_smem %s28, 16, [#allocation4], [#allocation7]
    $region5: #{tpu_custom_call.1} parent=1 // pred_fallthru
      _
    // Predicated region
    $region6: #{tpu_custom_call.1} parent=1 // pred_check
      _
    $region7: #{tpu_custom_call.1} parent=1 // pred_check_branch
      %32 = sbr.rel (0) target = $region9
    $region8: #{tpu_custom_call.1} parent=1 // pred_region
      %s34 = ssub.s32 512, 512
      %35 = vsyncadd [#allocation5], %s34
      %s36 = sshll.u32 [#allocation8], 4
      %s37 = int_to_ptr.vmem [resolvable:$true] %s36
      %42 = dma.hbm_to_vmem [thread:$0]  %s1, 512, %s37, [#allocation5], 128, 128, 8
    $region9: #{tpu_custom_call.1} parent=1 // pred_fallthru
      _
    // Predicated region
    $region10: #{tpu_custom_call.1} parent=1 // pred_check
      _
    $region11: #{tpu_custom_call.1} parent=1 // pred_check_branch
      %44 = sbr.rel (0) target = $region13
    $region12: #{tpu_custom_call.1} parent=1 // pred_region
      %s46 = ssub.s32 16, 16
      %47 = vsyncadd [#allocation10], %s46
      %s49 = sshll.u32 [#allocation9], 4
      %s50 = int_to_ptr.vmem [resolvable:$true] %s49
      %52 = dma.hbm_to_vmem [thread:$0]  %s2, 16, %s50, [#allocation10]
    $region13: #{tpu_custom_call.1} parent=1 // pred_fallthru
      _
    // Predicated region
    $region14: #{tpu_custom_call.1} parent=1 // pred_check
      _
    $region15: #{tpu_custom_call.1} parent=1 // pred_check_branch
      %54 = sbr.rel (0) target = $region17
    $region16: #{tpu_custom_call.1} parent=1 // pred_region
      %s56 = ssub.s32 16, 16
      %57 = vsyncadd [#allocation10], %s56
      %s59 = sshll.u32 [#allocation11], 4
      %s60 = int_to_ptr.vmem [resolvable:$true] %s59
      %62 = dma.hbm_to_vmem [thread:$0]  %s3, 16, %s60, [#allocation10]
    $region17: #{tpu_custom_call.1} parent=1 // pred_fallthru
      _
    // Predicated region
    $region18: #{tpu_custom_call.1} parent=1 // pred_check
      _
    $region19: #{tpu_custom_call.1} parent=1 // pred_check_branch
      %64 = sbr.rel (0) target = $region21
    $region20: #{tpu_custom_call.1} parent=1 // pred_region
      _
    $region21: #{tpu_custom_call.1} parent=1 // pred_fallthru
      _
    // Predicated region
    $region22: #{tpu_custom_call.1} parent=1 // pred_check
      _
    $region23: #{tpu_custom_call.1} parent=1 // pred_check_branch
      %66 = sbr.rel (0) target = $region25
    $region24: #{tpu_custom_call.1} parent=1 // pred_region
      _
    $region25: #{tpu_custom_call.1} parent=1 // pred_fallthru
      _
    // Predicated region
    $region26: #{tpu_custom_call.1} parent=1 // pred_check
      _
    $region27: #{tpu_custom_call.1} parent=1 // pred_check_branch
      %68 = sbr.rel (0) target = $region29
    $region28: #{tpu_custom_call.1} parent=1 // pred_region
      %69 = dma.done [#allocation7], 16
    $region29: #{tpu_custom_call.1} parent=1 // pred_fallthru
      _
    // Predicated region
    $region30: #{tpu_custom_call.1} parent=1 // pred_check
      _
    $region31: #{tpu_custom_call.1} parent=1 // pred_check_branch
      %71 = sbr.rel (0) target = $region33
    $region32: #{tpu_custom_call.1} parent=1 // pred_region
      %72 = dma.done [#allocation5], 512
    $region33: #{tpu_custom_call.1} parent=1 // pred_fallthru
      _
    // Predicated region
    $region34: #{tpu_custom_call.1} parent=1 // pred_check
      _
    $region35: #{tpu_custom_call.1} parent=1 // pred_check_branch
      %74 = sbr.rel (0) target = $region37
    $region36: #{tpu_custom_call.1} parent=1 // pred_region
      %75 = dma.done [#allocation10], 16
    $region37: #{tpu_custom_call.1} parent=1 // pred_fallthru
      _
    // Predicated region
    $region38: #{tpu_custom_call.1} parent=1 // pred_check
      _
    $region39: #{tpu_custom_call.1} parent=1 // pred_check_branch
      %77 = sbr.rel (0) target = $region41
    $region40: #{tpu_custom_call.1} parent=1 // pred_region
      %78 = dma.done [#allocation10], 16
    $region41: #{tpu_custom_call.1} parent=1 // pred_fallthru
      _
    %79 = sfence
    %p80 = scmp.eq.s32.totalorder 0, 0
    // Predicated region
    $region42: #{tpu_custom_call.1} parent=1 // pred_check
      %p81 = pneg %p80
    $region43: #{tpu_custom_call.1} parent=1 // pred_check_branch
      %83 = sbr.rel (%p81) target = $region45
    $region44: #{tpu_custom_call.1} parent=1 // pred_region
      %84 = vst [vmem:[#allocation2] sm:$0x1] 0.0
      %85 = vst [vmem:[#allocation3] sm:$0x1] 0.0
    $region45: #{tpu_custom_call.1} parent=1 // pred_fallthru
      _
    %v86 = vld [vmem:[#allocation8] sm:$0xff]
    %v87 = vld [vmem:[#allocation8 + $0x8] sm:$0xff]
    %v88 = vld [vmem:[#allocation8 + $0x10] sm:$0xff]
    %v89 = vld [vmem:[#allocation8 + $0x18] sm:$0xff]
    %v90 = vld [vmem:[#allocation2] sm:$0x1]
    %v91 = vadd.f32 %v86, %v87
    %v92 = vadd.f32 %v91, %v88
    %v93 = vadd.f32 %v92, %v89
    %v94 = vrot.slane %v93, 4
    %v95 = vadd.f32 %v93, %v94
    %v96 = vrot.slane %v95, 2
    %v97 = vadd.f32 %v95, %v96
    %v98 = vrot.slane %v97, 1
    %v99 = vadd.f32 %v97, %v98
    %v100 = vadd.f32 %v90, %v99
    %101 = vst [vmem:[#allocation2] sm:$0x1] %v100
    %v102 = vld [vmem:[#allocation3] sm:$0x1]
    %v103 = vmul.f32 %v86, %v86
    %v104 = vmul.f32 %v87, %v87
    %v105 = vmul.f32 %v88, %v88
    %v106 = vmul.f32 %v89, %v89
    %v107 = vadd.f32 %v103, %v104
    %v108 = vadd.f32 %v107, %v105
    %v109 = vadd.f32 %v108, %v106
    %v110 = vrot.slane %v109, 4
    %v111 = vadd.f32 %v109, %v110
    %v112 = vrot.slane %v111, 2
    %v113 = vadd.f32 %v111, %v112
    %v114 = vrot.slane %v113, 1
    %v115 = vadd.f32 %v113, %v114
    %v116 = vadd.f32 %v102, %v115
    %117 = vst [vmem:[#allocation3] sm:$0x1] %v116
    // Predicated region
    $region46: #{tpu_custom_call.1} parent=1 // pred_check
      %p118 = pneg %p80
    $region47: #{tpu_custom_call.1} parent=1 // pred_check_branch
      %120 = sbr.rel (%p118) target = $region49
    $region48: #{tpu_custom_call.1} parent=1 // pred_region
      %s121 = sld [smem:[#allocation4]]
      %s122 = sld [smem:[#allocation4 + $0x1]]
      %s123 = sld [smem:[#allocation4 + $0x2]]
      %v124 = vld [vmem:[#allocation2] sm:$0x1]
      %v125 = vstv %s121
      %v126 = vmul.f32 %v124, %v125
      %v127 = vld [vmem:[#allocation3] sm:$0x1]
      %v128 = vmul.f32 %v127, %v125
      %v129 = vmul.f32 %v126, %v126
      %v130 = vsub.f32 %v128, %v129
      %v131 = vmax.f32 %v130, 0.0
      %v132 = vadd.f32 %v131, 1e-05
      %v133 = vrsqrt.pop %v132
      %v134 = vmul.f32 %v132, %v133
      %vm135 = vcmp.eq.f32.partialorder %v132, inf
      %v136 = vsel %vm135, %v132, %v134
      %vm137 = vcmp.eq.f32.partialorder %v132, 0.0
      %v138 = vand.u32 %v132, 2147483648
      %v139 = vsel %vm137, %v138, %v136
      %v140 = vld [vmem:[#allocation9] sm:$0x1]
      %v141 = vld [vmem:[#allocation11] sm:$0x1]
      %v142 = vadd.f32 %v141, 1e-05
      %v143 = vrsqrt.pop %v142
      %v144 = vmul.f32 %v142, %v143
      %vm145 = vcmp.eq.f32.partialorder %v142, inf
      %v146 = vsel %vm145, %v142, %v144
      %vm147 = vcmp.eq.f32.partialorder %v142, 0.0
      %v148 = vand.u32 %v142, 2147483648
      %v149 = vsel %vm147, %v148, %v146
      %v150 = vrcp.pop %v149
      %v151 = vmul.f32 %v139, %v150
      %v152 = vmax.f32 %v151, 0.33333334
      %v153 = vmin.f32 %v152, 3.0
      %v154 = vsub.f32 %v126, %v140
      %v155 = vmul.f32 %v154, %v150
      %v156 = vmax.f32 %v155, -5.0
      %v157 = vmin.f32 %v156, 5.0
      %v158 = vsub.f32 %v153, 1.0
      %v159 = vstv %s122
      %v160 = vmul.f32 %v158, %v159
      %v161 = vadd.f32 %v160, 1.0
      %v162 = vmul.f32 %v157, %v159
      %v163 = vld [vmem:[%s4] sm:$0x1]
      %v164 = vmul.f32 %v163, %v161
      %v165 = vrcp.pop %v139
      %v166 = vmul.f32 %v164, %v165
      %167 = vst [vmem:[#allocation12] sm:$0x1] %v166
      %v168 = vmul.f32 %v163, %v162
      %v169 = vld [vmem:[%s5] sm:$0x1]
      %v170 = vadd.f32 %v168, %v169
      %v171 = vmul.f32 %v126, %v166
      %v172 = vsub.f32 %v170, %v171
      %173 = vst [vmem:[#allocation13] sm:$0x1] %v172
      %v174 = vstv %s123
      %v175 = vmul.f32 %v131, %v174
      %v176 = vsub.f32 %v175, %v141
      %v177 = vmul.f32 %v176, 0.01
      %v178 = vadd.f32 %v141, %v177
      %179 = vst [vmem:[#allocation16] sm:$0x1] %v178
      %v180 = vmul.f32 %v154, 0.01
      %v181 = vadd.f32 %v140, %v180
      %182 = vst [vmem:[#allocation15] sm:$0x1] %v181
    $region49: #{tpu_custom_call.1} parent=1 // pred_fallthru
      _
    // Predicated region
    $region50: #{tpu_custom_call.1} parent=1 // pred_check
      _
    $region51: #{tpu_custom_call.1} parent=1 // pred_check_branch
      %184 = sbr.rel (0) target = $region53
    $region52: #{tpu_custom_call.1} parent=1 // pred_region
      %s186 = ssub.s32 16, 16
      %187 = vsyncadd [#allocation6], %s186
      %s189 = sshll.u32 [#allocation12], 4
      %s190 = int_to_ptr.vmem [resolvable:$true] %s189
      %192 = dma.vmem_to_hbm [thread:$0]  %s190, 16, %s6, [#allocation6]
    $region53: #{tpu_custom_call.1} parent=1 // pred_fallthru
      _
    // Predicated region
    $region54: #{tpu_custom_call.1} parent=1 // pred_check
      _
    $region55: #{tpu_custom_call.1} parent=1 // pred_check_branch
      %194 = sbr.rel (0) target = $region57
    $region56: #{tpu_custom_call.1} parent=1 // pred_region
      %s196 = ssub.s32 16, 16
      %197 = vsyncadd [#allocation14], %s196
      %s199 = sshll.u32 [#allocation13], 4
      %s200 = int_to_ptr.vmem [resolvable:$true] %s199
      %202 = dma.vmem_to_hbm [thread:$0]  %s200, 16, %s7, [#allocation14]
    $region57: #{tpu_custom_call.1} parent=1 // pred_fallthru
      _
    // Predicated region
    $region58: #{tpu_custom_call.1} parent=1 // pred_check
      _
    $region59: #{tpu_custom_call.1} parent=1 // pred_check_branch
      %204 = sbr.rel (0) target = $region61
    $region60: #{tpu_custom_call.1} parent=1 // pred_region
      %s206 = ssub.s32 16, 16
      %207 = vsyncadd [#allocation14], %s206
      %s209 = sshll.u32 [#allocation15], 4
      %s210 = int_to_ptr.vmem [resolvable:$true] %s209
      %212 = dma.vmem_to_hbm [thread:$0]  %s210, 16, %s8, [#allocation14]
    $region61: #{tpu_custom_call.1} parent=1 // pred_fallthru
      _
    // Predicated region
    $region62: #{tpu_custom_call.1} parent=1 // pred_check
      _
    $region63: #{tpu_custom_call.1} parent=1 // pred_check_branch
      %214 = sbr.rel (0) target = $region65
    $region64: #{tpu_custom_call.1} parent=1 // pred_region
      %s216 = ssub.s32 16, 16
      %217 = vsyncadd [#allocation17], %s216
      %s219 = sshll.u32 [#allocation16], 4
      %s220 = int_to_ptr.vmem [resolvable:$true] %s219
      %222 = dma.vmem_to_hbm [thread:$0]  %s220, 16, %s9, [#allocation17]
    $region65: #{tpu_custom_call.1} parent=1 // pred_fallthru
      _
    // Predicated region
    $region66: #{tpu_custom_call.1} parent=1 // pred_check
      _
    $region67: #{tpu_custom_call.1} parent=1 // pred_check_branch
      %224 = sbr.rel (0) target = $region69
    $region68: #{tpu_custom_call.1} parent=1 // pred_region
      %225 = dma.done [#allocation6], 16
    $region69: #{tpu_custom_call.1} parent=1 // pred_fallthru
      _
    // Predicated region
    $region70: #{tpu_custom_call.1} parent=1 // pred_check
      _
    $region71: #{tpu_custom_call.1} parent=1 // pred_check_branch
      %227 = sbr.rel (0) target = $region73
    $region72: #{tpu_custom_call.1} parent=1 // pred_region
      %228 = dma.done [#allocation14], 16
    $region73: #{tpu_custom_call.1} parent=1 // pred_fallthru
      _
    // Predicated region
    $region74: #{tpu_custom_call.1} parent=1 // pred_check
      _
    $region75: #{tpu_custom_call.1} parent=1 // pred_check_branch
      %230 = sbr.rel (0) target = $region77
    $region76: #{tpu_custom_call.1} parent=1 // pred_region
      %231 = dma.done [#allocation14], 16
    $region77: #{tpu_custom_call.1} parent=1 // pred_fallthru
      _
    // Predicated region
    $region78: #{tpu_custom_call.1} parent=1 // pred_check
      _
    $region79: #{tpu_custom_call.1} parent=1 // pred_check_branch
      %233 = sbr.rel (0) target = $region81
    $region80: #{tpu_custom_call.1} parent=1 // pred_region
      %234 = dma.done [#allocation17], 16
    $region81: #{tpu_custom_call.1} parent=1 // pred_fallthru
      _
    %235 = vsyncpa [#allocation5], 1
    %236 = vsyncpa [#allocation10], 1
    %237 = vsyncpa [#allocation6], 1
    %238 = vsyncpa [#allocation14], 1
    %239 = vsyncpa [#allocation17], 1
    %240 = vsyncpa [#allocation7], 1

</llo_original>
